<compile_context>
chip_gen: v5e
topology: v5e:2x2
jax: 0.10.0
libtpu: 0.0.40
codegen_flags: <defaults>
</compile_context>

<pallas_src>
import math

import jax
import jax.numpy as jnp
from jax.experimental import pallas as pl
from jax.experimental.pallas import tpu as pltpu


def transfer_kernel(x_ref, w_ref, b_ref, p_ref, bn_ref, o_ref):
    # x_ref : [R, G*HIDDEN]   G original rows packed per VMEM row (lane-dense)
    # w_ref : [G*HIDDEN, G*FEAT]  block-diagonal copies of W_old^T  (resident)
    # b_ref : [1, G*FEAT]         tiled b_old                       (resident)
    # p_ref : [G*FEAT, G]         block-diagonal w_new columns      (resident)
    # bn_ref: [1, 1] SMEM         b_new scalar
    # o_ref : [R, G]
    #
    # old.forward(x) stand-in: Linear(HIDDEN, FEAT) + ReLU, computed for all G
    # packed rows at once on the MXU.
    h = jnp.dot(x_ref[...], w_ref[...],
                preferred_element_type=jnp.float32) + b_ref[...]
    h = jnp.maximum(h, 0.0)
    # new_layer Linear(FEAT, 1): folded into the [G*FEAT, G] selection matrix
    # -> one small MXU matmul producing a [R, G] result directly (no cross-lane
    # reduce, no [tile,1] -> [1,tile] relayout needed).
    z = jnp.dot(h, p_ref[...],
                preferred_element_type=jnp.float32) + bn_ref[0, 0]
    # Sigmoid (exp goes to the EUP).
    o_ref[...] = jax.nn.sigmoid(z)


def transfer_forward(x, w_old, b_old, w_new, b_new, *, tile_rows=16384):
    """x: [B, HIDDEN] f32.

    w_old: [FEAT, HIDDEN] (PyTorch Linear weight layout, out x in)
    b_old: [FEAT]
    w_new: [1, FEAT]
    b_new: [1]
    Returns [B, 1] f32 (sigmoid output), identical to
    sigmoid(relu(x @ w_old.T + b_old) @ w_new.T + b_new).
    """
    x = jnp.asarray(x, jnp.float32)
    B, hidden = x.shape
    feat = w_old.shape[0]

    # ---- parameter prep (pure-JAX glue, tiny) --------------------------------
    w_old_t = jnp.asarray(w_old, jnp.float32).T            # [HIDDEN, FEAT]
    b_old_f = jnp.asarray(b_old, jnp.float32)              # [FEAT]
    w_new_c = jnp.asarray(w_new, jnp.float32).reshape(feat, 1)  # [FEAT, 1]
    b_new_s = jnp.asarray(b_new, jnp.float32).reshape(1, 1)     # SMEM scalar

    # Row-packing factor: G original rows share one VMEM row. gcd keeps the
    # [B, HIDDEN] -> [B//G, G*HIDDEN] reshape a free row-major bitcast (never a
    # pad/copy); G=8 -> 256 lanes of x per packed row, output lane-width G.
    G = math.gcd(B, 8)
    rows = B // G
    xp = x.reshape(rows, G * hidden)

    eye = jnp.eye(G, dtype=jnp.float32)
    w_pack = jnp.kron(eye, w_old_t)                        # [G*HIDDEN, G*FEAT]
    b_pack = jnp.tile(b_old_f, G).reshape(1, G * feat)     # [1, G*FEAT]
    p_pack = jnp.kron(eye, w_new_c)                        # [G*FEAT, G]

    # ---- batch tiling (packed rows per grid step) ----------------------------
    # Target ~tile_rows original rows per step (>= ~2 MiB of x so the fixed
    # per-step pipeline overhead is amortized); cap at ceil(rows/2) so there
    # are >= 2 "parallel" steps for v7x's two TensorCores; keep a multiple of 8
    # sublanes (or the full extent for tiny batches).
    r_target = max(tile_rows // G, 8)
    if rows <= 8:
        r = rows
    else:
        r = min(r_target, -(-rows // 2))
        r = max((r // 8) * 8, 8)
    grid = (pl.cdiv(rows, r),)   # trailing partial block handled by Pallas

    # Advisory cost: tiny-FLOP, HBM-bandwidth-dominated op.
    flops = 2 * rows * (G * hidden) * (G * feat) + 2 * rows * (G * feat) * G
    bytes_accessed = (B * hidden + B) * 4 + (w_pack.size + b_pack.size
                                             + p_pack.size + 1) * 4

    out = pl.pallas_call(
        transfer_kernel,
        out_shape=jax.ShapeDtypeStruct((rows, G), jnp.float32),
        grid=grid,
        in_specs=[
            pl.BlockSpec((r, G * hidden), lambda i: (i, 0)),     # packed x tile
            pl.BlockSpec((G * hidden, G * feat), lambda i: (0, 0)),  # W blkdiag
            pl.BlockSpec((1, G * feat), lambda i: (0, 0)),           # b_old tiled
            pl.BlockSpec((G * feat, G), lambda i: (0, 0)),           # w_new blkdiag
            pl.BlockSpec(memory_space=pltpu.MemorySpace.SMEM),       # b_new scalar
        ],
        out_specs=pl.BlockSpec((r, G), lambda i: (i, 0)),
        compiler_params=pltpu.CompilerParams(
            dimension_semantics=("parallel",),
            vmem_limit_bytes=32 * 1024 * 1024),
        cost_estimate=pl.CostEstimate(flops=flops,
                                      transcendentals=B,
                                      bytes_accessed=bytes_accessed),
    )(xp, w_pack, b_pack, p_pack, b_new_s)

    # [rows, G] row-major == original row order; exact (G divides B), no slicing
    # of garbage needed.
    return out.reshape(B, 1)


def _reference(x, w_old, b_old, w_new, b_new):
    h = jnp.maximum(x @ w_old.T + b_old, 0.0)
    return jax.nn.sigmoid(h @ w_new.T + b_new)


if __name__ == "__main__":
    HIDDEN, FEAT, OUT = 32, 10, 1

    key = jax.random.PRNGKey(0)
    kx, kwo, kbo, kwn, kbn, kx2, kx3 = jax.random.split(key, 7)

    # Deterministic synthetic parameters (PyTorch-style uniform(-1/sqrt(in), 1/sqrt(in))).
    bound_old = 1.0 / jnp.sqrt(HIDDEN)
    w_old = jax.random.uniform(kwo, (FEAT, HIDDEN), jnp.float32, -bound_old, bound_old)
    b_old = jax.random.uniform(kbo, (FEAT,), jnp.float32, -bound_old, bound_old)

    bound_new = 1.0 / jnp.sqrt(FEAT)
    w_new = jax.random.uniform(kwn, (OUT, FEAT), jnp.float32, -bound_new, bound_new)
    b_new = jax.random.uniform(kbn, (OUT,), jnp.float32, -bound_new, bound_new)

    # Small demo batch: G=8 packing, single grid step.
    B = 8
    x = jax.random.normal(kx, (B, HIDDEN), dtype=jnp.float32)
    out = jax.block_until_ready(transfer_forward(x, w_old, b_old, w_new, b_new))
    ref = _reference(x, w_old, b_old, w_new, b_new)
    assert out.shape == (B, OUT), out.shape
    assert jnp.allclose(out, ref, atol=1e-5, rtol=1e-5), "mismatch vs reference (B=8)"

    # Non-multiple-of-8 batch: G=4 packing, multi-step grid with a partial
    # trailing block (no jnp.pad of x anywhere).
    B2 = 300
    x2 = jax.random.normal(kx2, (B2, HIDDEN), dtype=jnp.float32)
    out2 = jax.block_until_ready(
        transfer_forward(x2, w_old, b_old, w_new, b_new, tile_rows=128))
    ref2 = _reference(x2, w_old, b_old, w_new, b_new)
    assert out2.shape == (B2, OUT), out2.shape
    assert jnp.allclose(out2, ref2, atol=1e-5, rtol=1e-5), "mismatch vs reference (B=300)"

    # Odd batch: G=1 fallback (no packing possible), still correct.
    B3 = 7
    x3 = jax.random.normal(kx3, (B3, HIDDEN), dtype=jnp.float32)
    out3 = jax.block_until_ready(transfer_forward(x3, w_old, b_old, w_new, b_new))
    ref3 = _reference(x3, w_old, b_old, w_new, b_new)
    assert out3.shape == (B3, OUT), out3.shape
    assert jnp.allclose(out3, ref3, atol=1e-5, rtol=1e-5), "mismatch vs reference (B=7)"

    print("KERNEL_OK")
</pallas_src>

<mosaic_0001>
module attributes {stable_mosaic.version = 11 : i64} {
  func.func @transfer_kernel(%arg0: i32, %arg1: memref<1x256xf32, #tpu.memory_space<vmem>>, %arg2: memref<256x80xf32, #tpu.memory_space<vmem>>, %arg3: memref<1x80xf32, #tpu.memory_space<vmem>>, %arg4: memref<80x8xf32, #tpu.memory_space<vmem>>, %arg5: memref<1x1xf32, #tpu.memory_space<smem>>, %arg6: memref<1x8xf32, #tpu.memory_space<vmem>>) attributes {dimension_semantics = [#tpu.dimension_semantics<parallel>], iteration_bounds = array<i64: 1>, scalar_prefetch = 0 : i64, scratch_operands = 0 : i64, tpu.core_type = #tpu.core_type<tc>, window_params = [{transform_indices = @transform_0, window_bounds = array<i64: 1, 256>}, {pipeline_mode = #tpu.pipeline_mode<synchronous>, transform_indices = @transform_1, window_bounds = array<i64: 256, 80>}, {pipeline_mode = #tpu.pipeline_mode<synchronous>, transform_indices = @transform_2, window_bounds = array<i64: 1, 80>}, {pipeline_mode = #tpu.pipeline_mode<synchronous>, transform_indices = @transform_3, window_bounds = array<i64: 80, 8>}, {transform_indices = @transform_4, window_bounds = array<i64: 1, 1>}, {transform_indices = @transform_5, window_bounds = array<i64: 1, 8>}]} {
    %c0 = arith.constant 0 : index
    %c0_0 = arith.constant 0 : index
    %0 = vector.load %arg1[%c0, %c0_0] : memref<1x256xf32, #tpu.memory_space<vmem>>, vector<1x256xf32>
    %c0_1 = arith.constant 0 : index
    %c0_2 = arith.constant 0 : index
    %1 = vector.load %arg2[%c0_1, %c0_2] : memref<256x80xf32, #tpu.memory_space<vmem>>, vector<256x80xf32>
    %cst = arith.constant dense<0.000000e+00> : vector<1x80xf32>
    %2 = tpu.matmul %0, %1, %cst {dimension_numbers = #tpu.dot_dimension_numbers<[1], [0], [0], [1], [0, 0, 1, 1], [], []>} : vector<1x256xf32>, vector<256x80xf32>, vector<1x80xf32> -> vector<1x80xf32>
    %c0_3 = arith.constant 0 : index
    %c0_4 = arith.constant 0 : index
    %3 = vector.load %arg3[%c0_3, %c0_4] : memref<1x80xf32, #tpu.memory_space<vmem>>, vector<1x80xf32>
    %4 = arith.addf %2, %3 : vector<1x80xf32>
    %cst_5 = arith.constant 0.000000e+00 : f32
    %5 = vector.broadcast %cst_5 : f32 to vector<1x80xf32>
    %6 = arith.maximumf %4, %5 : vector<1x80xf32>
    %c0_6 = arith.constant 0 : index
    %c0_7 = arith.constant 0 : index
    %7 = vector.load %arg4[%c0_6, %c0_7] : memref<80x8xf32, #tpu.memory_space<vmem>>, vector<80x8xf32>
    %cst_8 = arith.constant dense<0.000000e+00> : vector<1x8xf32>
    %8 = tpu.matmul %6, %7, %cst_8 {dimension_numbers = #tpu.dot_dimension_numbers<[1], [0], [0], [1], [0, 0, 1, 1], [], []>} : vector<1x80xf32>, vector<80x8xf32>, vector<1x8xf32> -> vector<1x8xf32>
    %c0_9 = arith.constant 0 : index
    %c0_10 = arith.constant 0 : index
    %9 = memref.load %arg5[%c0_9, %c0_10] : memref<1x1xf32, #tpu.memory_space<smem>>
    %10 = vector.broadcast %9 : f32 to vector<1x8xf32>
    %11 = arith.addf %8, %10 : vector<1x8xf32>
    %12 = arith.negf %11 : vector<1x8xf32>
    %13 = math.exp %12 : vector<1x8xf32>
    %cst_11 = arith.constant 1.000000e+00 : f32
    %14 = vector.broadcast %cst_11 : f32 to vector<1x8xf32>
    %15 = arith.addf %14, %13 : vector<1x8xf32>
    %16 = arith.divf %14, %15 : vector<1x8xf32>
    %c0_12 = arith.constant 0 : index
    %c0_13 = arith.constant 0 : index
    %17 = vector.load %arg6[%c0_12, %c0_13] : memref<1x8xf32, #tpu.memory_space<vmem>>, vector<1x8xf32>
    tpu.vector_store %arg6[%c0_12, %c0_13], %16 {strides = array<i32>} : memref<1x8xf32, #tpu.memory_space<vmem>>, vector<1x8xf32>,
    return
  }
  func.func @transform_0(%arg0: i32) -> (i32, i32) {
    %c0_i32 = arith.constant 0 : i32
    %c0_i32_0 = arith.constant 0 : i32
    return %arg0, %c0_i32 : i32, i32
  }
  func.func @transform_1(%arg0: i32) -> (i32, i32) {
    %c0_i32 = arith.constant 0 : i32
    %c0_i32_0 = arith.constant 0 : i32
    %c0_i32_1 = arith.constant 0 : i32
    return %c0_i32, %c0_i32_0 : i32, i32
  }
  func.func @transform_2(%arg0: i32) -> (i32, i32) {
    %c0_i32 = arith.constant 0 : i32
    %c0_i32_0 = arith.constant 0 : i32
    %c0_i32_1 = arith.constant 0 : i32
    return %c0_i32, %c0_i32_0 : i32, i32
  }
  func.func @transform_3(%arg0: i32) -> (i32, i32) {
    %c0_i32 = arith.constant 0 : i32
    %c0_i32_0 = arith.constant 0 : i32
    %c0_i32_1 = arith.constant 0 : i32
    return %c0_i32, %c0_i32_0 : i32, i32
  }
  func.func @transform_4(%arg0: i32) -> (i32, i32) {
    %c0_i32 = arith.constant 0 : i32
    %c0_i32_0 = arith.constant 0 : i32
    %c0_i32_1 = arith.constant 0 : i32
    return %c0_i32, %c0_i32_0 : i32, i32
  }
  func.func @transform_5(%arg0: i32) -> (i32, i32) {
    %c0_i32 = arith.constant 0 : i32
    %c0_i32_0 = arith.constant 0 : i32
    return %arg0, %c0_i32 : i32, i32
  }
}

</mosaic_0001>

<llo_original>
// kernel: tpu_custom_call.1
$region0: #{tpu_custom_call.1}
  #allocation0 [shape = 'u32[]', space=smem, size = 0x4, offset = 0x4, fixed_abs, tag = 'smem constant byte address 0x4 - core index']
  #allocation1 [shape = 'u32[72,128]{1,0:T(1,128)}', space=vmem, size = 0x9000, scoped, tag = 'internal scratch']
  #allocation2 [shape = 'f32[1,1]{1,0:T(1,128)S(6)}', space=smem, size = 0x200, scoped, tag = 'scoped memory for tpu_custom_call.1']
  %s0 = inlined_call_operand.vmem [shape: f32[1,256], index: 0, kind: input, shape index: {}]
  %s1 = inlined_call_operand.vmem [shape: f32[256,80], index: 1, kind: input, shape index: {}]
  %s2 = inlined_call_operand.vmem [shape: f32[1,80], index: 2, kind: input, shape index: {}]
  %s3 = inlined_call_operand.vmem [shape: f32[80,8], index: 3, kind: input, shape index: {}]
  %s4 = inlined_call_operand.<no memory space> [shape: f32[1,1], index: 4, kind: input, shape index: {}]
  %s5 = inlined_call_operand.hbm [shape: f32[1,8], index: 5, kind: output, shape index: {}]
  %s6 = sld [smem:[#allocation0]]
  $region30: #{tpu_custom_call.1} parent=0
    _
  %s8 = ssub.s32 1, %s6
  %s9 = scalar_select 0, %s8, %s6
  %10 = sst [smem:[#allocation2]] %s4
  $region1: #{tpu_custom_call.1} parent=0
    #allocation3 [shape = 'u8[512]{0}', space=vmem, size = 0x400, scoped, tag = 'output window, operand 0, single buffered']
    #allocation4 [shape = 's32[1]{0}', space=sflag, size = 0x4, scoped, tag = 'scoped memory for tpu_custom_call.1']
    %11 = vsyncpa [#allocation4], 0
    // Predicated region
    $region2: #{tpu_custom_call.1} parent=1 // pred_check
      _
    $region3: #{tpu_custom_call.1} parent=1 // pred_check_branch
      %13 = sbr.rel (0) target = $region5
    $region4: #{tpu_custom_call.1} parent=1 // pred_region
      _
    $region5: #{tpu_custom_call.1} parent=1 // pred_fallthru
      _
    // Predicated region
    $region6: #{tpu_custom_call.1} parent=1 // pred_check
      _
    $region7: #{tpu_custom_call.1} parent=1 // pred_check_branch
      %15 = sbr.rel (0) target = $region9
    $region8: #{tpu_custom_call.1} parent=1 // pred_region
      _
    $region9: #{tpu_custom_call.1} parent=1 // pred_fallthru
      _
    // Predicated region
    $region10: #{tpu_custom_call.1} parent=1 // pred_check
      _
    $region11: #{tpu_custom_call.1} parent=1 // pred_check_branch
      %17 = sbr.rel (0) target = $region13
    $region12: #{tpu_custom_call.1} parent=1 // pred_region
      _
    $region13: #{tpu_custom_call.1} parent=1 // pred_fallthru
      _
    // Predicated region
    $region14: #{tpu_custom_call.1} parent=1 // pred_check
      _
    $region15: #{tpu_custom_call.1} parent=1 // pred_check_branch
      %19 = sbr.rel (0) target = $region17
    $region16: #{tpu_custom_call.1} parent=1 // pred_region
      _
    $region17: #{tpu_custom_call.1} parent=1 // pred_fallthru
      _
    // Predicated region
    $region18: #{tpu_custom_call.1} parent=1 // pred_check
      _
    $region19: #{tpu_custom_call.1} parent=1 // pred_check_branch
      %21 = sbr.rel (0) target = $region21
    $region20: #{tpu_custom_call.1} parent=1 // pred_region
      _
    $region21: #{tpu_custom_call.1} parent=1 // pred_fallthru
      _
    %v22 = vld [vmem:[%s0] sm:$0x3]
    %v23 = vld [vmem:[%s1] sm:$0xff]
    %v24 = vld [vmem:[%s1 + $0x8] sm:$0xff]
    %v25 = vld [vmem:[%s1 + $0x10] sm:$0xff]
    %v26 = vld [vmem:[%s1 + $0x18] sm:$0xff]
    %v27 = vld [vmem:[%s1 + $0x20] sm:$0xff]
    %v28 = vld [vmem:[%s1 + $0x28] sm:$0xff]
    %v29 = vld [vmem:[%s1 + $0x30] sm:$0xff]
    %v30 = vld [vmem:[%s1 + $0x38] sm:$0xff]
    %v31 = vld [vmem:[%s1 + $0x40] sm:$0xff]
    %v32 = vld [vmem:[%s1 + $0x48] sm:$0xff]
    %v33 = vld [vmem:[%s1 + $0x50] sm:$0xff]
    %v34 = vld [vmem:[%s1 + $0x58] sm:$0xff]
    %v35 = vld [vmem:[%s1 + $0x60] sm:$0xff]
    %v36 = vld [vmem:[%s1 + $0x68] sm:$0xff]
    %v37 = vld [vmem:[%s1 + $0x70] sm:$0xff]
    %v38 = vld [vmem:[%s1 + $0x78] sm:$0xff]
    %v39 = vld [vmem:[%s1 + $0x80] sm:$0xff]
    %v40 = vld [vmem:[%s1 + $0x88] sm:$0xff]
    %v41 = vld [vmem:[%s1 + $0x90] sm:$0xff]
    %v42 = vld [vmem:[%s1 + $0x98] sm:$0xff]
    %v43 = vld [vmem:[%s1 + $0xa0] sm:$0xff]
    %v44 = vld [vmem:[%s1 + $0xa8] sm:$0xff]
    %v45 = vld [vmem:[%s1 + $0xb0] sm:$0xff]
    %v46 = vld [vmem:[%s1 + $0xb8] sm:$0xff]
    %v47 = vld [vmem:[%s1 + $0xc0] sm:$0xff]
    %v48 = vld [vmem:[%s1 + $0xc8] sm:$0xff]
    %v49 = vld [vmem:[%s1 + $0xd0] sm:$0xff]
    %v50 = vld [vmem:[%s1 + $0xd8] sm:$0xff]
    %v51 = vld [vmem:[%s1 + $0xe0] sm:$0xff]
    %v52 = vld [vmem:[%s1 + $0xe8] sm:$0xff]
    %v53 = vld [vmem:[%s1 + $0xf0] sm:$0xff]
    %v54 = vld [vmem:[%s1 + $0xf8] sm:$0xff]
    %v55 = vld [vmem:[%s2] sm:$0x1]
    %v57 = vperm.slane %v22, 0
    %v58 = vperm.slane %v22, 1
    %61 = vmatpush.msra.mxu0 %v38
    %62 = vmatpush.msra.mxu0 %v37
    %63 = vmatpush.msra.mxu0 %v36
    %64 = vmatpush.msra.mxu0 %v35
    %65 = vmatpush.msra.mxu0 %v34
    %66 = vmatpush.msra.mxu0 %v33
    %67 = vmatpush.msra.mxu0 %v32
    %68 = vmatpush.msra.mxu0 %v31
    %69 = vmatpush.msra.mxu0 %v30
    %70 = vmatpush.msra.mxu0 %v29
    %71 = vmatpush.msra.mxu0 %v28
    %72 = vmatpush.msra.mxu0 %v27
    %73 = vmatpush.msra.mxu0 %v26
    %74 = vmatpush.msra.mxu0 %v25
    %75 = vmatpush.msra.mxu0 %v24
    %76 = vmatpush.msra.mxu0 %v23
    %77 = vmatmul.f32.gmra.mxu0 %v57
    %v78 = vpop.f32.mrf.mxu0
    %v79 = vadd.f32 %v55, %v78
    %80 = vdwg.mxu0
    %81 = vmatpush.msra.mxu0 %v54
    %82 = vmatpush.msra.mxu0 %v53
    %83 = vmatpush.msra.mxu0 %v52
    %84 = vmatpush.msra.mxu0 %v51
    %85 = vmatpush.msra.mxu0 %v50
    %86 = vmatpush.msra.mxu0 %v49
    %87 = vmatpush.msra.mxu0 %v48
    %88 = vmatpush.msra.mxu0 %v47
    %89 = vmatpush.msra.mxu0 %v46
    %90 = vmatpush.msra.mxu0 %v45
    %91 = vmatpush.msra.mxu0 %v44
    %92 = vmatpush.msra.mxu0 %v43
    %93 = vmatpush.msra.mxu0 %v42
    %94 = vmatpush.msra.mxu0 %v41
    %95 = vmatpush.msra.mxu0 %v40
    %96 = vmatpush.msra.mxu0 %v39
    %97 = vmatmul.f32.gmra.mxu0 %v58
    %v98 = vpop.f32.mrf.mxu0
    %v99 = vadd.f32 %v79, %v98
    %100 = vdwg.mxu0
    %v101 = vmax.f32 %v99, 0.0
    %v102 = vld [vmem:[%s3] sm:$0xff]
    %v103 = vld [vmem:[%s3 + $0x8] sm:$0xff]
    %v104 = vld [vmem:[%s3 + $0x10] sm:$0xff]
    %v105 = vld [vmem:[%s3 + $0x18] sm:$0xff]
    %v106 = vld [vmem:[%s3 + $0x20] sm:$0xff]
    %v107 = vld [vmem:[%s3 + $0x28] sm:$0xff]
    %v108 = vld [vmem:[%s3 + $0x30] sm:$0xff]
    %v109 = vld [vmem:[%s3 + $0x38] sm:$0xff]
    %v110 = vld [vmem:[%s3 + $0x40] sm:$0xff]
    %v111 = vld [vmem:[%s3 + $0x48] sm:$0xff]
    %s112 = sld [smem:[#allocation2]]
    %v113 = vstv %s112
    %vm114 = vcmask 654336
    %v116 = vsel %vm114, %v101, 0
    %118 = vmatpush.msra.mxu0 0.0
    %119 = vmatpush.msra.mxu0 0.0
    %120 = vmatpush.msra.mxu0 0.0
    %121 = vmatpush.msra.mxu0 0.0
    %122 = vmatpush.msra.mxu0 0.0
    %123 = vmatpush.msra.mxu0 0.0
    %124 = vmatpush.msra.mxu0 %v111
    %125 = vmatpush.msra.mxu0 %v110
    %126 = vmatpush.msra.mxu0 %v109
    %127 = vmatpush.msra.mxu0 %v108
    %128 = vmatpush.msra.mxu0 %v107
    %129 = vmatpush.msra.mxu0 %v106
    %130 = vmatpush.msra.mxu0 %v105
    %131 = vmatpush.msra.mxu0 %v104
    %132 = vmatpush.msra.mxu0 %v103
    %133 = vmatpush.msra.mxu0 %v102
    %134 = vmatmul.f32.gmra.mxu0 %v116
    %v135 = vpop.f32.mrf.mxu0
    %v136 = vadd.f32 %v113, %v135
    %137 = vdwg.mxu0
    %v138 = vxor.u32 %v136, 2147483648
    %v139 = vmul.f32 %v138, 1.442695
    %v140 = vpow.pop %v139
    %v141 = vadd.f32 %v140, 1.0
    %v142 = vrcp.pop %v141
    %v143 = vmul.f32 %v141, %v142
    %v144 = vsub.f32 1.0, %v143
    %v145 = vmul.f32 %v142, %v144
    %v146 = vadd.f32 %v142, %v145
    %vm147 = vweird.f32 %v141
    %vm148 = vweird.f32 %v142
    %vm149 = vmor %vm147, %vm148
    %v150 = vsel %vm149, %v142, %v146
    %v151 = vand.u32 2147483647, %v141
    %vm152 = vcmp.eq.f32.partialorder %v151, 8.507059e+37
    %v153 = vand.u32 %v141, 2147483648
    %v154 = vor.u32 1.1754944e-38, %v153
    %v155 = vsel %vm152, %v154, %v150
    %v156 = vmul.f32 1.0, %v155
    %vm157 = vcmask 57344
    %158 = vst.msk [vmem:[#allocation3] sm:$0x1] %vm157, %v156
    // Predicated region
    $region22: #{tpu_custom_call.1} parent=1 // pred_check
      _
    $region23: #{tpu_custom_call.1} parent=1 // pred_check_branch
      %160 = sbr.rel (0) target = $region25
    $region24: #{tpu_custom_call.1} parent=1 // pred_region
      %162 = vsyncadd [#allocation4], 0
      %s164 = sshll.u32 [#allocation3], 4
      %s165 = int_to_ptr.vmem [resolvable:$true] %s164
      %s166 = sshll.u32 %s5, 4
      %s167 = int_to_ptr.hbm [resolvable:$true] %s166
      %169 = dma.vmem_to_hbm [thread:$0]  %s165, 16, %s167, [#allocation4]
    $region25: #{tpu_custom_call.1} parent=1 // pred_fallthru
      _
    // Predicated region
    $region26: #{tpu_custom_call.1} parent=1 // pred_check
      _
    $region27: #{tpu_custom_call.1} parent=1 // pred_check_branch
      %171 = sbr.rel (0) target = $region29
    $region28: #{tpu_custom_call.1} parent=1 // pred_region
      %173 = dma.done [#allocation4], 16
    $region29: #{tpu_custom_call.1} parent=1 // pred_fallthru
      _
    %174 = vsyncpa [#allocation4], 1

</llo_original>
